<compile_context>
chip_gen: v7x
topology: tpu7x:2x2x1
jax: 0.10.0
libtpu: 0.0.40
codegen_flags: <defaults>
</compile_context>

<pallas_src>
import jax
import jax.numpy as jnp
from jax.experimental import pallas as pl
from jax.experimental.pallas import tpu as pltpu


_SMALL_INPUT_BYTES = 1 << 20  # below this, fused XLA beats custom-call overhead


def _swish_kernel(x_ref, o_ref):
    xf = x_ref[...].astype(jnp.float32)
    # sigmoid(x) = 0.5 * (tanh(0.5 * x) + 1)  -> one EUP op, no VALU divide.
    sig = 0.5 * (jnp.tanh(0.5 * xf) + 1.0)
    o_ref[...] = (xf * sig).astype(o_ref.dtype)


def _swish_xla(x):
    """Plain fused-XLA swish (used for tiny inputs and the unaligned tail)."""
    xf = x.astype(jnp.float32)
    return (xf * jax.nn.sigmoid(xf)).astype(x.dtype)


def _tpu_config():
    """Per-generation (block_bytes, vmem_limit_bytes_or_None, num_tensorcores)."""
    kind = ""
    try:
        kind = jax.devices()[0].device_kind.lower()
    except Exception:  # pragma: no cover - defensive; fall back to safe defaults
        pass
    if "v7" in kind or "7x" in kind:
        # 3.2 TB/s HBM, only 64 MiB physical VMEM (32 MiB default scoped),
        # 2 TensorCores per chip.
        return 4 * 1024 * 1024, 48 * 1024 * 1024, 2
    if "v6" in kind:
        # 4 buffers x 4 MiB = 16 MiB fits the 32 MiB default scoped VMEM.
        return 4 * 1024 * 1024, None, 1
    # v5e (and unknown chips): 2 MiB keeps 4 buffers inside the 16 MiB default
    # scoped VMEM and per-step overhead is already negligible at ~820 GB/s.
    return 2 * 1024 * 1024, None, 1


def _swish_flat_aligned(x_flat, *, target_block_bytes, vmem_limit_bytes, num_cores):
    """Swish on a flat array whose length is a multiple of 128. Returns flat."""
    n = x_flat.shape[0]
    dtype = x_flat.dtype
    itemsize = jnp.dtype(dtype).itemsize

    # Widest lane-dense last dim (multiple of 128) dividing n -> free reshape,
    # no padding, no output slice.
    last = 128
    for cand in (2048, 1024, 512, 256, 128):
        if n % cand == 0:
            last = cand
            break
    rows = n // last
    x2d = x_flat.reshape(rows, last)

    bytes_per_row = last * itemsize
    sublane_mult = max(8, 32 // itemsize)  # 8 for f32, 16 for bf16, 32 for int8
    desired_rows = max(1, target_block_bytes // bytes_per_row)
    if desired_rows >= rows or sublane_mult >= rows:
        block_rows = rows  # full extent: always legal
    else:
        block_rows = max(sublane_mult, (desired_rows // sublane_mult) * sublane_mult)

    # v7x: make sure both TensorCores get grid work -- never collapse a
    # reasonably sized input to a single grid step.
    if num_cores > 1 and rows >= num_cores * sublane_mult:
        if pl.cdiv(rows, block_rows) < num_cores:
            capped = (pl.cdiv(rows, num_cores) // sublane_mult) * sublane_mult
            block_rows = max(sublane_mult, capped)

    grid = (pl.cdiv(rows, block_rows),)

    out2d = pl.pallas_call(
        _swish_kernel,
        out_shape=jax.ShapeDtypeStruct((rows, last), dtype),
        grid=grid,
        in_specs=[pl.BlockSpec((block_rows, last), lambda i: (i, 0))],
        out_specs=pl.BlockSpec((block_rows, last), lambda i: (i, 0)),
        compiler_params=pltpu.CompilerParams(
            dimension_semantics=("parallel",),
            vmem_limit_bytes=vmem_limit_bytes,
        ),
        cost_estimate=pl.CostEstimate(
            flops=4 * n,
            transcendentals=n,
            bytes_accessed=2 * n * itemsize,
        ),
    )(x2d)

    return out2d.reshape(n)


def swish(x, *, target_block_bytes=None, vmem_limit_bytes=None,
          min_pallas_bytes=_SMALL_INPUT_BYTES):
    """Elementwise Swish. Accepts any shape; returns same shape/dtype."""
    orig_shape = x.shape
    dtype = x.dtype
    n = x.size
    if n == 0:
        return x
    itemsize = jnp.dtype(dtype).itemsize

    # Tiny inputs: single-block custom-call + pipeline overhead is pure loss;
    # let XLA fuse the elementwise op.
    if n * itemsize < min_pallas_bytes:
        return _swish_xla(x)

    chip_block_bytes, chip_vmem_limit, num_cores = _tpu_config()
    if target_block_bytes is None:
        target_block_bytes = chip_block_bytes
    if vmem_limit_bytes is None:
        vmem_limit_bytes = chip_vmem_limit

    x_flat = jnp.ravel(x)

    if n % 128 == 0:
        out_flat = _swish_flat_aligned(
            x_flat,
            target_block_bytes=target_block_bytes,
            vmem_limit_bytes=vmem_limit_bytes,
            num_cores=num_cores,
        )
    else:
        # Unaligned: kernel on the 128-aligned prefix (no pad/copy of the bulk),
        # plain XLA on the <=127-element tail.
        n_head = (n // 128) * 128
        if n_head == 0:
            return _swish_xla(x)
        head = _swish_flat_aligned(
            x_flat[:n_head],
            target_block_bytes=target_block_bytes,
            vmem_limit_bytes=vmem_limit_bytes,
            num_cores=num_cores,
        )
        tail = _swish_xla(x_flat[n_head:])
        out_flat = jnp.concatenate([head, tail])

    return out_flat.reshape(orig_shape)


if __name__ == "__main__":
    key = jax.random.PRNGKey(0)
    k1, k2, k3, k4 = jax.random.split(key, 4)

    # Shape consistent with Swish usage inside WavLM conv modules.
    # (Tiny -> routed to the fused-XLA fast path by design.)
    x = jax.random.normal(k1, (2, 4, 16, 16), dtype=jnp.float32)
    y = swish(x)
    jax.block_until_ready(y)
    assert y.shape == x.shape and y.dtype == x.dtype
    assert jnp.allclose(y, _swish_xla(x), atol=1e-5, rtol=1e-5)

    # Same small shape, forced through the Pallas kernel (single-block grid).
    y_p = swish(x, min_pallas_bytes=0)
    jax.block_until_ready(y_p)
    assert jnp.allclose(y_p, _swish_xla(x), atol=1e-5, rtol=1e-5)

    # Multi-block lane-dense slab with a masked partial last block.
    x2 = jax.random.normal(k2, (2, 512, 375), dtype=jnp.float32)
    y2 = swish(x2, target_block_bytes=64 * 1024, min_pallas_bytes=0)
    jax.block_until_ready(y2)
    assert jnp.allclose(y2, _swish_xla(x2), atol=1e-5, rtol=1e-5)

    # Unaligned total size: 128-aligned prefix through the kernel + XLA tail.
    x3 = jax.random.normal(k3, (3, 37, 129), dtype=jnp.float32)
    y3 = swish(x3, min_pallas_bytes=0)
    jax.block_until_ready(y3)
    assert y3.shape == x3.shape
    assert jnp.allclose(y3, _swish_xla(x3), atol=1e-5, rtol=1e-5)

    # bf16 path (halves HBM traffic for this mem-bound op).
    xb = jax.random.normal(k4, (4, 16, 512)).astype(jnp.bfloat16)
    yb = swish(xb, min_pallas_bytes=0)
    jax.block_until_ready(yb)
    assert yb.dtype == jnp.bfloat16
    assert jnp.allclose(
        yb.astype(jnp.float32), _swish_xla(xb).astype(jnp.float32),
        atol=2e-2, rtol=2e-2,
    )

    print("KERNEL_OK")
</pallas_src>

<mosaic_0001>
module attributes {stable_mosaic.version = 11 : i64} {
  func.func @_swish_kernel(%arg0: i32, %arg1: memref<1x2048xf32, #tpu.memory_space<vmem>>, %arg2: memref<1x2048xf32, #tpu.memory_space<vmem>>) attributes {dimension_semantics = [#tpu.dimension_semantics<parallel>], iteration_bounds = array<i64: 1>, scalar_prefetch = 0 : i64, scratch_operands = 0 : i64, tpu.core_type = #tpu.core_type<tc>, window_params = [{transform_indices = @transform_0, window_bounds = array<i64: 1, 2048>}, {transform_indices = @transform_1, window_bounds = array<i64: 1, 2048>}]} {
    %c0 = arith.constant 0 : index
    %c0_0 = arith.constant 0 : index
    %0 = vector.load %arg1[%c0, %c0_0] : memref<1x2048xf32, #tpu.memory_space<vmem>>, vector<1x2048xf32>
    %cst = arith.constant 5.000000e-01 : f32
    %1 = vector.broadcast %cst : f32 to vector<1x2048xf32>
    %2 = arith.mulf %1, %0 : vector<1x2048xf32>
    %3 = math.tanh %2 : vector<1x2048xf32>
    %cst_1 = arith.constant 1.000000e+00 : f32
    %4 = vector.broadcast %cst_1 : f32 to vector<1x2048xf32>
    %5 = arith.addf %3, %4 : vector<1x2048xf32>
    %cst_2 = arith.constant 5.000000e-01 : f32
    %6 = vector.broadcast %cst_2 : f32 to vector<1x2048xf32>
    %7 = arith.mulf %6, %5 : vector<1x2048xf32>
    %8 = arith.mulf %0, %7 : vector<1x2048xf32>
    %c0_3 = arith.constant 0 : index
    %c0_4 = arith.constant 0 : index
    %9 = vector.load %arg2[%c0_3, %c0_4] : memref<1x2048xf32, #tpu.memory_space<vmem>>, vector<1x2048xf32>
    tpu.vector_store %arg2[%c0_3, %c0_4], %8 {strides = array<i32>} : memref<1x2048xf32, #tpu.memory_space<vmem>>, vector<1x2048xf32>,
    return
  }
  func.func @transform_0(%arg0: i32) -> (i32, i32) {
    %c0_i32 = arith.constant 0 : i32
    %c0_i32_0 = arith.constant 0 : i32
    return %arg0, %c0_i32 : i32, i32
  }
  func.func @transform_1(%arg0: i32) -> (i32, i32) {
    %c0_i32 = arith.constant 0 : i32
    %c0_i32_0 = arith.constant 0 : i32
    return %arg0, %c0_i32 : i32, i32
  }
}

</mosaic_0001>

<llo_original>
// kernel: tpu_custom_call.1
$region0: #{tpu_custom_call.1}
  #allocation0 [shape = 'u32[]', space=smem, size = 0x4, offset = 0x4, fixed_abs, tag = 'smem constant byte address 0x4 - core index']
  #allocation1 [shape = 'u32[144,128]{1,0:T(1,128)}', space=vmem, size = 0x12000, scoped, tag = 'internal scratch']
  %s0 = inlined_call_operand.hbm [shape: f32[1,2048], index: 0, kind: input, shape index: {}]
  %s1 = inlined_call_operand.hbm [shape: f32[1,2048], index: 1, kind: output, shape index: {}]
  %s2 = sld [smem:[#allocation0]]
  $region18: #{tpu_custom_call.1} parent=0
    _
  %s4 = ssub.s32 1, %s2
  %s5 = scalar_select 0, %s4, %s2
  $region1: #{tpu_custom_call.1} parent=0
    #allocation2 [shape = 'u8[8192]{0}', space=vmem, size = 0x2000, scoped, tag = 'input window, operand 0, single buffered']
    #allocation3 [shape = 's32[1]{0}', space=sflag, size = 0x4, scoped, tag = 'scoped memory for tpu_custom_call.1']
    #allocation4 [shape = 's32[1]{0}', space=sflag, size = 0x4, scoped, tag = 'scoped memory for tpu_custom_call.1']
    #allocation5 [shape = 'u8[8192]{0}', space=vmem, size = 0x2000, scoped, tag = 'output window, operand 0, single buffered']
    %6 = vsyncpa [#allocation3], 0
    %7 = vsyncpa [#allocation4], 0
    // Predicated region
    $region2: #{tpu_custom_call.1} parent=1 // pred_check
      _
    $region3: #{tpu_custom_call.1} parent=1 // pred_check_branch
      %9 = sbr.rel (0) target = $region5
    $region4: #{tpu_custom_call.1} parent=1 // pred_region
      %s11 = ssub.s32 256, 256
      %12 = vsyncadd [#allocation3], %s11
      %s14 = sshll.u32 [#allocation2], 4
      %s15 = int_to_ptr.vmem [resolvable:$true] %s14
      %17 = dma.hbm_to_vmem [thread:$0]  %s0, 256, %s15, [#allocation3]
    $region5: #{tpu_custom_call.1} parent=1 // pred_fallthru
      _
    // Predicated region
    $region6: #{tpu_custom_call.1} parent=1 // pred_check
      _
    $region7: #{tpu_custom_call.1} parent=1 // pred_check_branch
      %19 = sbr.rel (0) target = $region9
    $region8: #{tpu_custom_call.1} parent=1 // pred_region
      %20 = dma.done [#allocation3], 256
    $region9: #{tpu_custom_call.1} parent=1 // pred_fallthru
      _
    %v21 = vld [vmem:[#allocation2] sm:$0xff]
    %v22 = vld [vmem:[#allocation2 + $0x8] sm:$0xff]
    %v23 = vmul.f32 %v21, 0.5
    %v24 = vmul.f32 %v22, 0.5
    %v25 = vtanh.pop %v23
    %v26 = vtanh.pop %v24
    %v27 = vadd.f32 %v25, 1.0
    %v28 = vadd.f32 %v26, 1.0
    %v29 = vmul.f32 %v27, 0.5
    %v30 = vmul.f32 %v28, 0.5
    %v31 = vmul.f32 %v21, %v29
    %v32 = vmul.f32 %v22, %v30
    %33 = vst [vmem:[#allocation5] sm:$0xff] %v31
    %34 = vst [vmem:[#allocation5 + $0x8] sm:$0xff] %v32
    // Predicated region
    $region10: #{tpu_custom_call.1} parent=1 // pred_check
      _
    $region11: #{tpu_custom_call.1} parent=1 // pred_check_branch
      %36 = sbr.rel (0) target = $region13
    $region12: #{tpu_custom_call.1} parent=1 // pred_region
      %s38 = ssub.s32 256, 256
      %39 = vsyncadd [#allocation4], %s38
      %s41 = sshll.u32 [#allocation5], 4
      %s42 = int_to_ptr.vmem [resolvable:$true] %s41
      %44 = dma.vmem_to_hbm [thread:$0]  %s42, 256, %s1, [#allocation4]
    $region13: #{tpu_custom_call.1} parent=1 // pred_fallthru
      _
    // Predicated region
    $region14: #{tpu_custom_call.1} parent=1 // pred_check
      _
    $region15: #{tpu_custom_call.1} parent=1 // pred_check_branch
      %46 = sbr.rel (0) target = $region17
    $region16: #{tpu_custom_call.1} parent=1 // pred_region
      %47 = dma.done [#allocation4], 256
    $region17: #{tpu_custom_call.1} parent=1 // pred_fallthru
      _
    %48 = vsyncpa [#allocation3], 1
    %49 = vsyncpa [#allocation4], 1

</llo_original>
